<compile_context>
chip_gen: v7x
topology: tpu7x:2x2x1
jax: 0.10.0
libtpu: 0.0.40
codegen_flags: <defaults>
</compile_context>

<pallas_src>
import jax
import jax.numpy as jnp
from jax.experimental import pallas as pl
from jax.experimental.pallas import tpu as pltpu


def _round_up(x, m):
    return ((x + m - 1) // m) * m


# ----------------------------- kernel ---------------------------------------


def mlp_kernel(x_ref, w1_ref, b1_ref, w2_ref, b2_ref, o_ref):
    # x_ref:  (tm, in_pad)   bf16
    # w1_ref: (in_pad, th)   bf16     b1_ref: (1, th)       f32
    # w2_ref: (th, out_pad)  bf16     b2_ref: (1, out_pad)  f32
    # o_ref:  (tm, out_pad)  f32  -- block index (i, 0) for every k, so it stays
    #                               VMEM-resident across the h-reduction and
    #                               doubles as the f32 accumulator (no scratch).
    k = pl.program_id(1)

    # fc1 (partial over this h tile) + bias + ReLU, f32 accumulate on the MXU.
    h = jnp.dot(x_ref[...], w1_ref[...], preferred_element_type=jnp.float32)
    h = jnp.maximum(h + b1_ref[...], 0.0)
    # Dropout with p = 0.0 is the identity at both dropout sites in the module.
    # TODO(synk): non-zero dropout would need pltpu.prng_random_bits masking here.

    # fc2 partial contribution of this h tile (bf16 operands, f32 accumulate).
    contrib = jnp.dot(h.astype(jnp.bfloat16), w2_ref[...],
                      preferred_element_type=jnp.float32)

    @pl.when(k == 0)
    def _():
        o_ref[...] = contrib + b2_ref[...]

    @pl.when(k > 0)
    def _():
        o_ref[...] += contrib


# --------------------------- wrapper / tiling --------------------------------


def _vmem_limit_bytes():
    # Per-chip limit: ~75% of physical VMEM (v7x only has 64 MiB per TensorCore),
    # capped at 96 MiB on the 128 MiB chips (v5e / v6e).
    try:
        cap = int(pltpu.get_tpu_info().vmem_capacity_bytes)
    except Exception:
        cap = 64 << 20  # conservative (v7x-sized) fallback
    return min((cap * 3) // 4, 96 << 20)


def _vmem_bytes(tm, th, in_pad, out_pad):
    # Conservative working-set estimate (inputs/outputs counted double-buffered).
    x_b = 2 * tm * in_pad * 2            # bf16 activations
    w1_b = 2 * in_pad * th * 2           # bf16 W1 tile
    w2_b = 2 * th * out_pad * 2          # bf16 W2 tile
    b_b = 2 * (th + out_pad) * 4         # f32 biases
    o_b = 2 * tm * out_pad * 4           # f32 output / accumulator tile
    h_b = tm * th * 6                    # f32 fc1 temp + bf16 copy for fc2
    return x_b + w1_b + w2_b + b_b + o_b + h_b


def _select_tiles(M, h_pad, in_pad, out_pad, tm_max, budget):
    # Row tile: arithmetic intensity vs weight traffic ~= tm FLOP/byte; go as big
    # as rows / VMEM allow (HBM-roofline ridge ~670 FLOP/B on v6e, ~310 on v7x).
    tm = min(tm_max, _round_up(M, 8))
    # Keep >= 2 row tiles so both v7x TensorCores get work on the "parallel" axis.
    if M > 8 and _round_up(M, tm) // tm < 2:
        tm = max(8, _round_up(-(-M // 2), 8))

    # Prefer weights-resident (single k step): W1/W2 DMA'd once for the whole call.
    if _vmem_bytes(tm, h_pad, in_pad, out_pad) <= budget:
        return tm, h_pad

    th = 512 if h_pad % 512 == 0 else h_pad
    while tm > 8 and _vmem_bytes(tm, th, in_pad, out_pad) > budget:
        tm = max(8, _round_up(tm // 2, 8))
    # TODO(synk): for very wide in_dim on v7x an in_dim reduction axis (fc1
    # accumulator, ReLU only after the full in-reduction) would be needed instead
    # of just shrinking tm.
    return tm, th


def preprocess_params(w1, b1, w2, b2):
    """One-time parameter prep (hoisted out of the per-call path): zero-pad feature
    dims to the 128-lane width and cast weights to bf16. Zero-padded b1 / W1
    columns give padded h columns = ReLU(0) = 0, which hit zero W2 rows, so the
    padding never leaks into the result."""
    in_dim, h_dim = w1.shape
    out_d = w2.shape[1]

    in_pad = _round_up(in_dim, 128)
    out_pad = _round_up(out_d, 128)
    h_pad = _round_up(h_dim, 128)
    if h_pad > 512:
        h_pad = _round_up(h_pad, 512)  # a 512-wide h tile always divides it

    w1_p = jnp.pad(w1, ((0, in_pad - in_dim), (0, h_pad - h_dim))).astype(jnp.bfloat16)
    b1_p = jnp.pad(b1, (0, h_pad - h_dim)).reshape(1, h_pad).astype(jnp.float32)
    w2_p = jnp.pad(w2, ((0, h_pad - h_dim), (0, out_pad - out_d))).astype(jnp.bfloat16)
    b2_p = jnp.pad(b2, (0, out_pad - out_d)).reshape(1, out_pad).astype(jnp.float32)
    return (w1_p, b1_p, w2_p, b2_p), (in_dim, h_dim, out_d)


def mlp_transformer(x, padded_params, dims, *, tm_max=512):
    """x: [B, S, in_dim]. padded_params/dims come from preprocess_params()."""
    w1_p, b1_p, w2_p, b2_p = padded_params
    in_dim, _, out_d = dims
    B, S, _ = x.shape
    M = B * S

    in_pad, h_pad = w1_p.shape
    out_pad = w2_p.shape[1]

    vmem_limit = _vmem_limit_bytes()
    tm, th = _select_tiles(M, h_pad, in_pad, out_pad, tm_max, (vmem_limit * 9) // 10)
    M_pad = _round_up(M, tm)
    n_k = h_pad // th

    x2d = x.reshape(M, in_dim)
    x2d = jnp.pad(x2d, ((0, M_pad - M), (0, in_pad - in_dim))).astype(jnp.bfloat16)

    out2d = pl.pallas_call(
        mlp_kernel,
        out_shape=jax.ShapeDtypeStruct((M_pad, out_pad), jnp.float32),
        grid_spec=pltpu.PrefetchScalarGridSpec(
            num_scalar_prefetch=0,
            grid=(M_pad // tm, n_k),
            in_specs=[
                pl.BlockSpec((tm, in_pad), lambda i, k: (i, 0)),
                pl.BlockSpec((in_pad, th), lambda i, k: (0, k)),
                pl.BlockSpec((1, th), lambda i, k: (0, k)),
                pl.BlockSpec((th, out_pad), lambda i, k: (k, 0)),
                pl.BlockSpec((1, out_pad), lambda i, k: (0, 0)),
            ],
            out_specs=pl.BlockSpec((tm, out_pad), lambda i, k: (i, 0)),
        ),
        compiler_params=pltpu.CompilerParams(
            dimension_semantics=("parallel", "arbitrary"),
            vmem_limit_bytes=vmem_limit,
        ),
    )(x2d, w1_p, b1_p, w2_p, b2_p)

    return out2d[:M, :out_d].reshape(B, S, out_d)


# ------------------------------- test ----------------------------------------


if __name__ == "__main__":
    # Small shapes consistent with MlpTransformer(in_dim, h_dim).
    B, S = 2, 8
    in_dim, h_dim = 32, 64
    out_d = in_dim  # out_d defaults to in_dim

    key = jax.random.PRNGKey(0)
    kx, k1, kb1, k2, kb2 = jax.random.split(key, 5)

    x = jax.random.normal(kx, (B, S, in_dim), dtype=jnp.float32)

    # Deterministic synthetic params. nn.Linear weight shape is (out, in); we store
    # the transposed (in, out) layout expected by the kernel.
    w1 = jax.random.normal(k1, (in_dim, h_dim), dtype=jnp.float32) * 0.05
    b1 = jax.random.normal(kb1, (h_dim,), dtype=jnp.float32) * 0.05
    w2 = jax.random.normal(k2, (h_dim, out_d), dtype=jnp.float32) * 0.05
    b2 = jax.random.normal(kb2, (out_d,), dtype=jnp.float32) * 0.05

    params, dims = preprocess_params(w1, b1, w2, b2)  # one-time weight prep
    out = mlp_transformer(x, params, dims)
    out = jax.block_until_ready(out)

    # Pure-JAX f32 reference (kernel uses bf16 operands -> loosened tolerance).
    ref = jnp.maximum(x.reshape(-1, in_dim) @ w1 + b1, 0.0) @ w2 + b2
    ref = ref.reshape(B, S, out_d)
    assert out.shape == ref.shape
    assert jnp.allclose(out, ref, atol=2e-2, rtol=2e-2), (
        float(jnp.max(jnp.abs(out - ref))))

    print("KERNEL_OK")
</pallas_src>

<mosaic_0001>
module attributes {stable_mosaic.version = 11 : i64} {
  func.func @mlp_kernel(%arg0: i32, %arg1: i32, %arg2: memref<8x128xbf16, #tpu.memory_space<vmem>>, %arg3: memref<128x128xbf16, #tpu.memory_space<vmem>>, %arg4: memref<1x128xf32, #tpu.memory_space<vmem>>, %arg5: memref<128x128xbf16, #tpu.memory_space<vmem>>, %arg6: memref<1x128xf32, #tpu.memory_space<vmem>>, %arg7: memref<8x128xf32, #tpu.memory_space<vmem>>) attributes {dimension_semantics = [#tpu.dimension_semantics<parallel>, #tpu.dimension_semantics<arbitrary>], iteration_bounds = array<i64: 2, 1>, scalar_prefetch = 0 : i64, scratch_operands = 0 : i64, tpu.core_type = #tpu.core_type<tc>, window_params = [{transform_indices = @transform_0, window_bounds = array<i64: 8, 128>}, {transform_indices = @transform_1, window_bounds = array<i64: 128, 128>}, {transform_indices = @transform_2, window_bounds = array<i64: 1, 128>}, {transform_indices = @transform_3, window_bounds = array<i64: 128, 128>}, {pipeline_mode = #tpu.pipeline_mode<synchronous>, transform_indices = @transform_4, window_bounds = array<i64: 1, 128>}, {transform_indices = @transform_5, window_bounds = array<i64: 8, 128>}]} {
    %c0 = arith.constant 0 : index
    %c0_0 = arith.constant 0 : index
    %0 = vector.load %arg2[%c0, %c0_0] : memref<8x128xbf16, #tpu.memory_space<vmem>>, vector<8x128xbf16>
    %c0_1 = arith.constant 0 : index
    %c0_2 = arith.constant 0 : index
    %1 = vector.load %arg3[%c0_1, %c0_2] : memref<128x128xbf16, #tpu.memory_space<vmem>>, vector<128x128xbf16>
    %cst = arith.constant dense<0.000000e+00> : vector<8x128xf32>
    %2 = tpu.matmul %0, %1, %cst {dimension_numbers = #tpu.dot_dimension_numbers<[1], [0], [0], [1], [0, 0, 1, 1], [], []>} : vector<8x128xbf16>, vector<128x128xbf16>, vector<8x128xf32> -> vector<8x128xf32>
    %c0_3 = arith.constant 0 : index
    %c0_4 = arith.constant 0 : index
    %3 = vector.load %arg4[%c0_3, %c0_4] : memref<1x128xf32, #tpu.memory_space<vmem>>, vector<1x128xf32>
    %4 = vector.broadcast %3 : vector<1x128xf32> to vector<8x128xf32>
    %5 = arith.addf %2, %4 : vector<8x128xf32>
    %cst_5 = arith.constant 0.000000e+00 : f32
    %6 = vector.broadcast %cst_5 : f32 to vector<8x128xf32>
    %7 = arith.maximumf %5, %6 : vector<8x128xf32>
    %8 = arith.truncf %7 : vector<8x128xf32> to vector<8x128xbf16>
    %c0_6 = arith.constant 0 : index
    %c0_7 = arith.constant 0 : index
    %9 = vector.load %arg5[%c0_6, %c0_7] : memref<128x128xbf16, #tpu.memory_space<vmem>>, vector<128x128xbf16>
    %cst_8 = arith.constant dense<0.000000e+00> : vector<8x128xf32>
    %10 = tpu.matmul %8, %9, %cst_8 {dimension_numbers = #tpu.dot_dimension_numbers<[1], [0], [0], [1], [0, 0, 1, 1], [], []>} : vector<8x128xbf16>, vector<128x128xbf16>, vector<8x128xf32> -> vector<8x128xf32>
    %c0_i32 = arith.constant 0 : i32
    %11 = arith.cmpi eq, %arg1, %c0_i32 : i32
    %12 = arith.extui %11 : i1 to i32
    %c0_i32_9 = arith.constant 0 : i32
    %13 = arith.cmpi ne, %12, %c0_i32_9 : i32
    scf.if %13 {
      %c0_12 = arith.constant 0 : index
      %c0_13 = arith.constant 0 : index
      %17 = vector.load %arg6[%c0_12, %c0_13] : memref<1x128xf32, #tpu.memory_space<vmem>>, vector<1x128xf32>
      %18 = vector.broadcast %17 : vector<1x128xf32> to vector<8x128xf32>
      %19 = arith.addf %10, %18 : vector<8x128xf32>
      %c0_14 = arith.constant 0 : index
      %c0_15 = arith.constant 0 : index
      %20 = vector.load %arg7[%c0_14, %c0_15] : memref<8x128xf32, #tpu.memory_space<vmem>>, vector<8x128xf32>
      tpu.vector_store %arg7[%c0_14, %c0_15], %19 {strides = array<i32>} : memref<8x128xf32, #tpu.memory_space<vmem>>, vector<8x128xf32>,
    } else {
    }
    %c0_i32_10 = arith.constant 0 : i32
    %14 = arith.cmpi sgt, %arg1, %c0_i32_10 : i32
    %15 = arith.extui %14 : i1 to i32
    %c0_i32_11 = arith.constant 0 : i32
    %16 = arith.cmpi ne, %15, %c0_i32_11 : i32
    scf.if %16 {
      %c0_12 = arith.constant 0 : index
      %c0_13 = arith.constant 0 : index
      %17 = vector.load %arg7[%c0_12, %c0_13] : memref<8x128xf32, #tpu.memory_space<vmem>>, vector<8x128xf32>
      %18 = arith.addf %17, %10 : vector<8x128xf32>
      %c0_14 = arith.constant 0 : index
      %c0_15 = arith.constant 0 : index
      %19 = vector.load %arg7[%c0_14, %c0_15] : memref<8x128xf32, #tpu.memory_space<vmem>>, vector<8x128xf32>
      tpu.vector_store %arg7[%c0_14, %c0_15], %18 {strides = array<i32>} : memref<8x128xf32, #tpu.memory_space<vmem>>, vector<8x128xf32>,
    } else {
    }
    return
  }
  func.func @transform_0(%arg0: i32, %arg1: i32) -> (i32, i32) {
    %c0_i32 = arith.constant 0 : i32
    %c0_i32_0 = arith.constant 0 : i32
    return %arg0, %c0_i32 : i32, i32
  }
  func.func @transform_1(%arg0: i32, %arg1: i32) -> (i32, i32) {
    %c0_i32 = arith.constant 0 : i32
    %c0_i32_0 = arith.constant 0 : i32
    return %c0_i32, %arg1 : i32, i32
  }
  func.func @transform_2(%arg0: i32, %arg1: i32) -> (i32, i32) {
    %c0_i32 = arith.constant 0 : i32
    %c0_i32_0 = arith.constant 0 : i32
    return %c0_i32, %arg1 : i32, i32
  }
  func.func @transform_3(%arg0: i32, %arg1: i32) -> (i32, i32) {
    %c0_i32 = arith.constant 0 : i32
    %c0_i32_0 = arith.constant 0 : i32
    return %arg1, %c0_i32 : i32, i32
  }
  func.func @transform_4(%arg0: i32, %arg1: i32) -> (i32, i32) {
    %c0_i32 = arith.constant 0 : i32
    %c0_i32_0 = arith.constant 0 : i32
    %c0_i32_1 = arith.constant 0 : i32
    return %c0_i32, %c0_i32_0 : i32, i32
  }
  func.func @transform_5(%arg0: i32, %arg1: i32) -> (i32, i32) {
    %c0_i32 = arith.constant 0 : i32
    %c0_i32_0 = arith.constant 0 : i32
    return %arg0, %c0_i32 : i32, i32
  }
}

</mosaic_0001>

<llo_original>
// kernel: tpu_custom_call.1
$region0: #{tpu_custom_call.1}
  #allocation0 [shape = 'u32[]', space=smem, size = 0x4, offset = 0x4, fixed_abs, tag = 'smem constant byte address 0x4 - core index']
  #allocation1 [shape = 'u32[144,128]{1,0:T(1,128)}', space=vmem, size = 0x12000, scoped, tag = 'internal scratch']
  %s0 = inlined_call_operand.hbm [shape: bf16[16,128], index: 0, kind: input, shape index: {}]
  %s1 = inlined_call_operand.hbm [shape: bf16[128,128], index: 1, kind: input, shape index: {}]
  %s2 = inlined_call_operand.vmem [shape: f32[1,128], index: 2, kind: input, shape index: {}]
  %s3 = inlined_call_operand.hbm [shape: bf16[128,128], index: 3, kind: input, shape index: {}]
  %s4 = inlined_call_operand.vmem [shape: f32[1,128], index: 4, kind: input, shape index: {}]
  %s5 = inlined_call_operand.hbm [shape: f32[16,128], index: 5, kind: output, shape index: {}]
  %s6 = sld [smem:[#allocation0]]
  $region73: #{tpu_custom_call.1} parent=0
    _
  %s8 = ssub.s32 1, %s6
  %s9 = scalar_select 0, %s8, %s6
  $region1: #{tpu_custom_call.1} parent=0
    #allocation2 [shape = 'u8[4096]{0}', space=vmem, size = 0x1000, scoped, tag = 'input window, operand 0']
    #allocation3 [shape = 's32[2]{0}', space=sflag, size = 0x8, scoped, tag = 'scoped memory for tpu_custom_call.1']
    #allocation4 [shape = 's32[2]{0}', space=sflag, size = 0x8, scoped, tag = 'scoped memory for tpu_custom_call.1']
    #allocation5 [shape = 'u8[32768]{0}', space=vmem, size = 0x8000, scoped, tag = 'input window, operand 1, single buffered']
    #allocation6 [shape = 's32[1]{0}', space=sflag, size = 0x4, scoped, tag = 'scoped memory for tpu_custom_call.1']
    #allocation7 [shape = 'u8[32768]{0}', space=vmem, size = 0x8000, scoped, tag = 'input window, operand 3, single buffered']
    #allocation8 [shape = 'u8[8192]{0}', space=vmem, size = 0x2000, scoped, tag = 'output window, operand 0']
    %10 = vsyncpa [#allocation3], 0
    %s11 = scalar_lea.sflag [#allocation3], 1
    %12 = vsyncpa %s11, 0
    %13 = vsyncpa [#allocation6], 0
    %14 = vsyncpa [#allocation4], 0
    %s15 = scalar_lea.sflag [#allocation4], 1
    %16 = vsyncpa %s15, 0
    loop: start=0, step=1, limit=4
    $region2: #{tpu_custom_call.1} parent=1 // loop_pre_header
      _
    $region3: #{tpu_custom_call.1} parent=1 // loop_header
      %s18 = sphi 0, %s22
      %p19 = scmp.ge.s32.totalorder %s18, 4
      %s25 = sphi 0, %s37
      %s26 = sphi 0, %s33
      %s27 = sphi 0, %s25
      %s28 = sphi 0, %s26
      %s29 = sphi 0, %s27
      %s30 = sphi 0, %s28
      %s40 = sphi 0, %s42
      %s43 = sphi 0, %s40
      %s44 = sphi 0, %s43
      %s60 = sphi 0, %s44
      %s66 = sphi 0, %s68
      %s69 = sphi 0, %s66
      %s70 = sphi 0, %s69
      %s86 = sphi 0, %s70
      %s92 = sphi 0, %s94
      %s95 = sphi 0, %s92
      %s96 = sphi 0, %s95
      %s112 = sphi 0, %s96
      %s118 = sphi 0, %s120
      %s121 = sphi 0, %s118
      %s122 = sphi 0, %s121
      %s138 = sphi 0, %s122
      %s142 = sphi 0, %s142
      %s144 = sphi 0, %s142
      %s145 = sphi 0, %s144
      %s159 = sphi 0, %s145
      %s165 = sphi 0, %s167
      %s168 = sphi 0, %s165
      %s169 = sphi 0, %s168
      %s185 = sphi 0, %s169
    $region4: #{tpu_custom_call.1} parent=1 // loop_header_branch
      %21 = sbr.rel (%p19) target = $region8
    $region5: #{tpu_custom_call.1} parent=1 // loop_body
      %s23 = ssub.s32 %s18, 1
      %s24 = ssub.s32 %s18, 2
      %s31 = sadd.s32 1, %s26
      %p32 = scmp.ge.s32.totalorder %s31, 1
      %s33 = scalar_select %p32, 0, %s31
      %s34 = sadd.s32 1, %s25
      %s35 = scalar_select %p32, %s34, %s25
      %p36 = scmp.ge.s32.totalorder %s35, 2
      %s37 = scalar_select %p36, 0, %s35
      %s38 = ssub.s32 %s25, %s37
      %p39 = scmp.eq.s32.totalorder %s38, 0
      %s41 = sadd.s32 %s40, 1
      %s42 = scalar_select %p39, %s40, %s41
      %p45 = pneg %p39
      %p46 = scmp.eq.s32.totalorder %s18, 1
      %p47 = por %p45, %p46
      %p48 = scmp.ne.s32.totalorder %s40, %s43
      %p49 = scmp.eq.s32.totalorder %s18, 0
      %p50 = por %p48, %p49
      %p51 = scmp.ne.s32.totalorder %s40, %s43
      %p52 = scmp.eq.s32.totalorder %s23, 1
      %p53 = por %p51, %p52
      %p54 = scmp.ne.s32.totalorder %s43, %s44
      %p55 = scmp.eq.s32.totalorder %s23, 0
      %p56 = por %p54, %p55
      %p57 = scmp.ne.s32.totalorder %s43, %s44
      %p58 = scmp.eq.s32.totalorder %s24, 1
      %p59 = por %p57, %p58
      %p61 = scmp.ne.s32.totalorder %s44, %s60
      %p62 = scmp.eq.s32.totalorder %s24, 0
      %p63 = por %p61, %p62
      %s64 = ssub.s32 %s26, %s33
      %p65 = scmp.eq.s32.totalorder %s64, 0
      %s67 = sadd.s32 %s66, 1
      %s68 = scalar_select %p65, %s66, %s67
      %p71 = pneg %p65
      %p72 = scmp.eq.s32.totalorder %s18, 1
      %p73 = por %p71, %p72
      %p74 = scmp.ne.s32.totalorder %s66, %s69
      %p75 = scmp.eq.s32.totalorder %s18, 0
      %p76 = por %p74, %p75
      %p77 = scmp.ne.s32.totalorder %s66, %s69
      %p78 = scmp.eq.s32.totalorder %s23, 1
      %p79 = por %p77, %p78
      %p80 = scmp.ne.s32.totalorder %s69, %s70
      %p81 = scmp.eq.s32.totalorder %s23, 0
      %p82 = por %p80, %p81
      %p83 = scmp.ne.s32.totalorder %s69, %s70
      %p84 = scmp.eq.s32.totalorder %s24, 1
      %p85 = por %p83, %p84
      %p87 = scmp.ne.s32.totalorder %s70, %s86
      %p88 = scmp.eq.s32.totalorder %s24, 0
      %p89 = por %p87, %p88
      %s90 = ssub.s32 %s26, %s33
      %p91 = scmp.eq.s32.totalorder %s90, 0
      %s93 = sadd.s32 %s92, 1
      %s94 = scalar_select %p91, %s92, %s93
      %p97 = pneg %p91
      %p98 = scmp.eq.s32.totalorder %s18, 1
      %p99 = por %p97, %p98
      %p100 = scmp.ne.s32.totalorder %s92, %s95
      %p101 = scmp.eq.s32.totalorder %s18, 0
      %p102 = por %p100, %p101
      %p103 = scmp.ne.s32.totalorder %s92, %s95
      %p104 = scmp.eq.s32.totalorder %s23, 1
      %p105 = por %p103, %p104
      %p106 = scmp.ne.s32.totalorder %s95, %s96
      %p107 = scmp.eq.s32.totalorder %s23, 0
      %p108 = por %p106, %p107
      %p109 = scmp.ne.s32.totalorder %s95, %s96
      %p110 = scmp.eq.s32.totalorder %s24, 1
      %p111 = por %p109, %p110
      %p113 = scmp.ne.s32.totalorder %s96, %s112
      %p114 = scmp.eq.s32.totalorder %s24, 0
      %p115 = por %p113, %p114
      %s116 = ssub.s32 %s26, %s33
      %p117 = scmp.eq.s32.totalorder %s116, 0
      %s119 = sadd.s32 %s118, 1
      %s120 = scalar_select %p117, %s118, %s119
      %p123 = pneg %p117
      %p124 = scmp.eq.s32.totalorder %s18, 1
      %p125 = por %p123, %p124
      %p126 = scmp.ne.s32.totalorder %s118, %s121
      %p127 = scmp.eq.s32.totalorder %s18, 0
      %p128 = por %p126, %p127
      %p129 = scmp.ne.s32.totalorder %s118, %s121
      %p130 = scmp.eq.s32.totalorder %s23, 1
      %p131 = por %p129, %p130
      %p132 = scmp.ne.s32.totalorder %s121, %s122
      %p133 = scmp.eq.s32.totalorder %s23, 0
      %p134 = por %p132, %p133
      %p135 = scmp.ne.s32.totalorder %s121, %s122
      %p136 = scmp.eq.s32.totalorder %s24, 1
      %p137 = por %p135, %p136
      %p139 = scmp.ne.s32.totalorder %s122, %s138
      %p140 = scmp.eq.s32.totalorder %s24, 0
      %p141 = por %p139, %p140
      %s143 = sadd.s32 %s142, 1
      %p146 = scmp.eq.s32.totalorder %s18, 1
      %p147 = scmp.ne.s32.totalorder %s142, %s144
      %p148 = scmp.eq.s32.totalorder %s18, 0
      %p149 = por %p147, %p148
      %p150 = scmp.ne.s32.totalorder %s142, %s144
      %p151 = scmp.eq.s32.totalorder %s23, 1
      %p152 = por %p150, %p151
      %p153 = scmp.ne.s32.totalorder %s144, %s145
      %p154 = scmp.eq.s32.totalorder %s23, 0
      %p155 = por %p153, %p154
      %p156 = scmp.ne.s32.totalorder %s144, %s145
      %p157 = scmp.eq.s32.totalorder %s24, 1
      %p158 = por %p156, %p157
      %p160 = scmp.ne.s32.totalorder %s145, %s159
      %p161 = scmp.eq.s32.totalorder %s24, 0
      %p162 = por %p160, %p161
      %s163 = ssub.s32 %s25, %s37
      %p164 = scmp.eq.s32.totalorder %s163, 0
      %s166 = sadd.s32 %s165, 1
      %s167 = scalar_select %p164, %s165, %s166
      %p170 = pneg %p164
      %p171 = scmp.eq.s32.totalorder %s18, 1
      %p172 = por %p170, %p171
      %p173 = scmp.ne.s32.totalorder %s165, %s168
      %p174 = scmp.eq.s32.totalorder %s18, 0
      %p175 = por %p173, %p174
      %p176 = scmp.ne.s32.totalorder %s165, %s168
      %p177 = scmp.eq.s32.totalorder %s23, 1
      %p178 = por %p176, %p177
      %p179 = scmp.ne.s32.totalorder %s168, %s169
      %p180 = scmp.eq.s32.totalorder %s23, 0
      %p181 = por %p179, %p180
      %p182 = scmp.ne.s32.totalorder %s168, %s169
      %p183 = scmp.eq.s32.totalorder %s24, 1
      %p184 = por %p182, %p183
      %p186 = scmp.ne.s32.totalorder %s169, %s185
      %p187 = scmp.eq.s32.totalorder %s24, 0
      %p188 = por %p186, %p187
      %p189 = scmp.le.s32.totalorder 1, %s18
      %p190 = scmp.lt.s32.totalorder %s18, 3
      %p191 = pnand %p189, %p190
      %p192 = pneg %p191
      // Predicated region
      $region9: #{tpu_custom_call.1} parent=5 // pred_check
        _
      $region10: #{tpu_custom_call.1} parent=5 // pred_check_branch
        %194 = sbr.rel (%p191) target = $region12
      $region11: #{tpu_custom_call.1} parent=5 // pred_region
        %s195 = ssub.s32 %s18, 1
        // Predicated region
        $region13: #{tpu_custom_call.1} parent=11 // pred_check
          %p196 = pneg %p82
        $region14: #{tpu_custom_call.1} parent=11 // pred_check_branch
          %198 = sbr.rel (%p196) target = $region16
        $region15: #{tpu_custom_call.1} parent=11 // pred_region
          %s200 = ssub.s32 1024, 1024
          %201 = vsyncadd [#allocation6], %s200
          %s202 = smul.addr %s28, 64
          %s203 = scalar_lea.hbm %s1, %s202
          %s204 = sshll.u32 [#allocation5], 4
          %s205 = int_to_ptr.vmem [resolvable:$true] %s204
          %210 = dma.hbm_to_vmem [thread:$0]  %s203, 1024, %s205, [#allocation6], 64, 64, 4
        $region16: #{tpu_custom_call.1} parent=11 // pred_fallthru
          _
        // Predicated region
        $region17: #{tpu_custom_call.1} parent=11 // pred_check
          %p211 = pneg %p108
        $region18: #{tpu_custom_call.1} parent=11 // pred_check_branch
          %213 = sbr.rel (%p211) target = $region20
        $region19: #{tpu_custom_call.1} parent=11 // pred_region
          %p214 = scmp.lt.s32.totalorder %s28, 0
          %s215 = scalar_select %p214, %s28, 0
          %s216 = scalar_lea.vmem %s2, %s215
        $region20: #{tpu_custom_call.1} parent=11 // pred_fallthru
          _
        // Predicated region
        $region21: #{tpu_custom_call.1} parent=11 // pred_check
          %p217 = pneg %p134
        $region22: #{tpu_custom_call.1} parent=11 // pred_check_branch
          %219 = sbr.rel (%p217) target = $region24
        $region23: #{tpu_custom_call.1} parent=11 // pred_region
          %s220 = smul.u32 16, %s28
          %s222 = ssub.s32 1024, 1024
          %223 = vsyncadd [#allocation6], %s222
          %s224 = smul.addr %s220, 64
          %s225 = scalar_lea.hbm %s3, %s224
          %s226 = sshll.u32 [#allocation7], 4
          %s227 = int_to_ptr.vmem [resolvable:$true] %s226
          %232 = dma.hbm_to_vmem [thread:$0]  %s225, 1024, %s227, [#allocation6], 64, 64, 4
        $region24: #{tpu_custom_call.1} parent=11 // pred_fallthru
          _
        // Predicated region
        $region25: #{tpu_custom_call.1} parent=11 // pred_check
          %p233 = pneg %p155
        $region26: #{tpu_custom_call.1} parent=11 // pred_check_branch
          %235 = sbr.rel (%p233) target = $region28
        $region27: #{tpu_custom_call.1} parent=11 // pred_region
          _
        $region28: #{tpu_custom_call.1} parent=11 // pred_fallthru
          _
      $region12: #{tpu_custom_call.1} parent=5 // pred_fallthru
        _
      %p236 = scmp.lt.s32.totalorder %s18, 2
      // Predicated region
      $region29: #{tpu_custom_call.1} parent=5 // pred_check
        %p237 = pneg %p236
      $region30: #{tpu_custom_call.1} parent=5 // pred_check_branch
        %239 = sbr.rel (%p237) target = $region32
      $region31: #{tpu_custom_call.1} parent=5 // pred_region
        // Predicated region
        $region33: #{tpu_custom_call.1} parent=31 // pred_check
          %p240 = pneg %p50
        $region34: #{tpu_custom_call.1} parent=31 // pred_check_branch
          %242 = sbr.rel (%p240) target = $region36
        $region35: #{tpu_custom_call.1} parent=31 // pred_region
          %s243 = sand.u32 %s40, 1
          %s244 = scalar_lea.sflag [#allocation3], %s243
          %s245 = sand.u32 %s40, 1
          %s246 = smul.addr %s245, 4
          %s247 = scalar_lea.vmem [#allocation2], %s246
          %s249 = ssub.s32 64, 64
          %250 = vsyncadd %s244, %s249
          %s251 = smul.addr %s25, 64
          %s252 = scalar_lea.hbm %s0, %s251
          %s254 = sshll.u32 %s247, 4
          %s255 = int_to_ptr.vmem [resolvable:$true] %s254
          %257 = dma.hbm_to_vmem [thread:$0]  %s252, 64, %s255, %s244
        $region36: #{tpu_custom_call.1} parent=31 // pred_fallthru
          _
      $region32: #{tpu_custom_call.1} parent=5 // pred_fallthru
        _
      %p258 = scmp.le.s32.totalorder 1, %s18
      %p259 = scmp.lt.s32.totalorder %s18, 3
      %p260 = pnand %p258, %p259
      %p261 = pneg %p260
      // Predicated region
      $region37: #{tpu_custom_call.1} parent=5 // pred_check
        _
      $region38: #{tpu_custom_call.1} parent=5 // pred_check_branch
        %263 = sbr.rel (%p260) target = $region40
      $region39: #{tpu_custom_call.1} parent=5 // pred_region
        %s264 = ssub.s32 %s18, 1
        %s265 = sand.u32 %s43, 1
        %s266 = scalar_lea.sflag [#allocation3], %s265
        %s267 = sand.u32 %s43, 1
        %s268 = smul.addr %s267, 4
        %s269 = scalar_lea.vmem [#allocation2], %s268
        // Predicated region
        $region41: #{tpu_custom_call.1} parent=39 // pred_check
          %p270 = pneg %p56
        $region42: #{tpu_custom_call.1} parent=39 // pred_check_branch
          %272 = sbr.rel (%p270) target = $region44
        $region43: #{tpu_custom_call.1} parent=39 // pred_region
          %273 = dma.done %s266, 64
        $region44: #{tpu_custom_call.1} parent=39 // pred_fallthru
          _
        // Predicated region
        $region45: #{tpu_custom_call.1} parent=39 // pred_check
          %p274 = pneg %p82
        $region46: #{tpu_custom_call.1} parent=39 // pred_check_branch
          %276 = sbr.rel (%p274) target = $region48
        $region47: #{tpu_custom_call.1} parent=39 // pred_region
          %277 = dma.done [#allocation6], 1024
        $region48: #{tpu_custom_call.1} parent=39 // pred_fallthru
          _
        // Predicated region
        $region49: #{tpu_custom_call.1} parent=39 // pred_check
          %p278 = pneg %p134
        $region50: #{tpu_custom_call.1} parent=39 // pred_check_branch
          %280 = sbr.rel (%p278) target = $region52
        $region51: #{tpu_custom_call.1} parent=39 // pred_region
          %281 = dma.done [#allocation6], 1024
        $region52: #{tpu_custom_call.1} parent=39 // pred_fallthru
          _
        %s282 = sand.u32 %s43, 1
        %s283 = scalar_lea.sflag [#allocation3], %s282
        %s284 = sand.u32 %s43, 1
        %s285 = smul.addr %s284, 4
        %s286 = scalar_lea.vmem [#allocation2], %s285
        %p287 = pneg %p56
        %p288 = pneg %p53
        %p289 = pneg %p82
        %p290 = pneg %p79
        %p291 = scmp.lt.s32.totalorder %s28, 0
        %s292 = scalar_select %p291, %s28, 0
        %s293 = scalar_lea.vmem %s2, %s292
        %p294 = pneg %p108
        %p295 = pneg %p105
        %p296 = pneg %p134
        %p297 = pneg %p131
        %p298 = pneg %p155
        %p299 = pneg %p152
        %p300 = pneg %p181
        %p301 = pneg %p178
        %s302 = sand.u32 %s168, 1
        %s303 = scalar_lea.sflag [#allocation4], %s302
        %s304 = sand.u32 %s168, 1
        %s305 = smul.addr %s304, 8
        %s306 = scalar_lea.vmem [#allocation8], %s305
        %p307 = scmp.lt.s32.totalorder %s28, 0
        %s308 = scalar_select %p307, %s28, 0
        %s309 = scalar_lea.vmem %s2, %s308
        %s310 = smul.u32 16, %s28
        %v312 = vld [vmem:[%s269] sm:$0xf]
        %v313 = vld [vmem:[#allocation5] sm:$0xf]
        %v314 = vld [vmem:[#allocation5 + $0x4] sm:$0xf]
        %v315 = vld [vmem:[#allocation5 + $0x8] sm:$0xf]
        %v316 = vld [vmem:[#allocation5 + $0xc] sm:$0xf]
        %v317 = vld [vmem:[#allocation5 + $0x10] sm:$0xf]
        %v318 = vld [vmem:[#allocation5 + $0x14] sm:$0xf]
        %v319 = vld [vmem:[#allocation5 + $0x18] sm:$0xf]
        %v320 = vld [vmem:[#allocation5 + $0x1c] sm:$0xf]
        %v321 = vld [vmem:[#allocation5 + $0x20] sm:$0xf]
        %v322 = vld [vmem:[#allocation5 + $0x24] sm:$0xf]
        %v323 = vld [vmem:[#allocation5 + $0x28] sm:$0xf]
        %v324 = vld [vmem:[#allocation5 + $0x2c] sm:$0xf]
        %v325 = vld [vmem:[#allocation5 + $0x30] sm:$0xf]
        %v326 = vld [vmem:[#allocation5 + $0x34] sm:$0xf]
        %v327 = vld [vmem:[#allocation5 + $0x38] sm:$0xf]
        %v328 = vld [vmem:[#allocation5 + $0x3c] sm:$0xf]
        %v329 = vld [vmem:[%s309] sm:$0x1]
        %v331 = vlaneseq
        %v332 = vshrl.u32 %v331, 7
        %v333 = vsub.s32 0, %v332
        %v334 = vrot.slane %v329, %v333
        %v352 = vunpack.c.l.b16 %v313
        %v353 = vunpack.c.l.b16 %v314
        %v354 = vunpack.c.l.b16 %v315
        %v355 = vunpack.c.l.b16 %v316
        %v356 = vunpack.c.l.b16 %v317
        %v357 = vunpack.c.l.b16 %v318
        %v358 = vunpack.c.l.b16 %v319
        %v359 = vunpack.c.l.b16 %v320
        %v360 = vunpack.c.l.b16 %v321
        %v361 = vunpack.c.l.b16 %v322
        %v362 = vunpack.c.l.b16 %v323
        %v363 = vunpack.c.l.b16 %v324
        %v364 = vunpack.c.l.b16 %v325
        %v365 = vunpack.c.l.b16 %v326
        %v366 = vunpack.c.l.b16 %v327
        %v367 = vunpack.c.l.b16 %v328
        %v368 = vpack.c.b16 %v353, %v352
        %v369 = vpack.c.b16 %v355, %v354
        %v370 = vpack.c.b16 %v357, %v356
        %v371 = vpack.c.b16 %v359, %v358
        %v372 = vpack.c.b16 %v361, %v360
        %v373 = vpack.c.b16 %v363, %v362
        %v374 = vpack.c.b16 %v365, %v364
        %v375 = vpack.c.b16 %v367, %v366
        %384 = vmatprep.subr.bf16.mxu0 0
        %385 = vmatpush1.bf16.msra.mxu0 %v368
        %386 = vmatprep.subr.bf16.mxu0 0
        %387 = vmatpush1.bf16.msra.mxu0 %v369
        %388 = vmatprep.subr.bf16.mxu0 0
        %389 = vmatpush1.bf16.msra.mxu0 %v370
        %390 = vmatprep.subr.bf16.mxu0 0
        %391 = vmatpush1.bf16.msra.mxu0 %v371
        %392 = vmatprep.subr.bf16.mxu0 0
        %393 = vmatpush1.bf16.msra.mxu0 %v372
        %394 = vmatprep.subr.bf16.mxu0 0
        %395 = vmatpush1.bf16.msra.mxu0 %v373
        %396 = vmatprep.subr.bf16.mxu0 0
        %397 = vmatpush1.bf16.msra.mxu0 %v374
        %398 = vmatprep.subr.bf16.mxu0 0
        %399 = vmatpush1.bf16.msra.mxu0 %v375
        %400 = vmatprep.subr.bf16.mxu0 0
        %401 = vmatpush1.bf16.msra.mxu0 0
        %402 = vmatprep.subr.bf16.mxu0 0
        %403 = vmatpush1.bf16.msra.mxu0 0
        %404 = vmatprep.subr.bf16.mxu0 0
        %405 = vmatpush1.bf16.msra.mxu0 0
        %406 = vmatprep.subr.bf16.mxu0 0
        %407 = vmatpush1.bf16.msra.mxu0 0
        %408 = vmatprep.subr.bf16.mxu0 0
        %409 = vmatpush1.bf16.msra.mxu0 0
        %410 = vmatprep.subr.bf16.mxu0 0
        %411 = vmatpush1.bf16.msra.mxu0 0
        %412 = vmatprep.subr.bf16.mxu0 0
        %413 = vmatpush1.bf16.msra.mxu0 0
        %414 = vmatprep.subr.bf16.mxu0 0
        %415 = vmatpush1.bf16.msra.mxu0 0
        %416 = vmatprep.mubr.bf16.mxu0 0
        %417 = vmatmul.mubr.bf16.gmra.mrb[0].mxu0 %v312
        %v418 = vpop.f32.mrb[0].mxu0
        %v419 = vadd.f32 %v334, %v418
        %v420 = vpop.f32.mrb[0].mxu0
        %v421 = vpop.f32.mrb[0].mxu0
        %v422 = vpop.f32.mrb[0].mxu0
        %423 = vdwg.mxu0
        %v424 = vmax.f32 %v419, 0.0
        %v425 = vpack.c.bf16 %v424, %v424
        %v426 = vld [vmem:[#allocation7] sm:$0xf]
        %v427 = vld [vmem:[#allocation7 + $0x4] sm:$0xf]
        %v428 = vld [vmem:[#allocation7 + $0x8] sm:$0xf]
        %v429 = vld [vmem:[#allocation7 + $0xc] sm:$0xf]
        %v430 = vld [vmem:[#allocation7 + $0x10] sm:$0xf]
        %v431 = vld [vmem:[#allocation7 + $0x14] sm:$0xf]
        %v432 = vld [vmem:[#allocation7 + $0x18] sm:$0xf]
        %v433 = vld [vmem:[#allocation7 + $0x1c] sm:$0xf]
        %v434 = vld [vmem:[#allocation7 + $0x20] sm:$0xf]
        %v435 = vld [vmem:[#allocation7 + $0x24] sm:$0xf]
        %v436 = vld [vmem:[#allocation7 + $0x28] sm:$0xf]
        %v437 = vld [vmem:[#allocation7 + $0x2c] sm:$0xf]
        %v438 = vld [vmem:[#allocation7 + $0x30] sm:$0xf]
        %v439 = vld [vmem:[#allocation7 + $0x34] sm:$0xf]
        %v440 = vld [vmem:[#allocation7 + $0x38] sm:$0xf]
        %v441 = vld [vmem:[#allocation7 + $0x3c] sm:$0xf]
        %v458 = vunpack.c.l.b16 %v426
        %v459 = vunpack.c.l.b16 %v427
        %v460 = vunpack.c.l.b16 %v428
        %v461 = vunpack.c.l.b16 %v429
        %v462 = vunpack.c.l.b16 %v430
        %v463 = vunpack.c.l.b16 %v431
        %v464 = vunpack.c.l.b16 %v432
        %v465 = vunpack.c.l.b16 %v433
        %v466 = vunpack.c.l.b16 %v434
        %v467 = vunpack.c.l.b16 %v435
        %v468 = vunpack.c.l.b16 %v436
        %v469 = vunpack.c.l.b16 %v437
        %v470 = vunpack.c.l.b16 %v438
        %v471 = vunpack.c.l.b16 %v439
        %v472 = vunpack.c.l.b16 %v440
        %v473 = vunpack.c.l.b16 %v441
        %v474 = vpack.c.b16 %v459, %v458
        %v475 = vpack.c.b16 %v461, %v460
        %v476 = vpack.c.b16 %v463, %v462
        %v477 = vpack.c.b16 %v465, %v464
        %v478 = vpack.c.b16 %v467, %v466
        %v479 = vpack.c.b16 %v469, %v468
        %v480 = vpack.c.b16 %v471, %v470
        %v481 = vpack.c.b16 %v473, %v472
        %490 = vmatprep.subr.bf16.mxu0 0
        %491 = vmatpush1.bf16.msra.mxu0 %v474
        %492 = vmatprep.subr.bf16.mxu0 0
        %493 = vmatpush1.bf16.msra.mxu0 %v475
        %494 = vmatprep.subr.bf16.mxu0 0
        %495 = vmatpush1.bf16.msra.mxu0 %v476
        %496 = vmatprep.subr.bf16.mxu0 0
        %497 = vmatpush1.bf16.msra.mxu0 %v477
        %498 = vmatprep.subr.bf16.mxu0 0
        %499 = vmatpush1.bf16.msra.mxu0 %v478
        %500 = vmatprep.subr.bf16.mxu0 0
        %501 = vmatpush1.bf16.msra.mxu0 %v479
        %502 = vmatprep.subr.bf16.mxu0 0
        %503 = vmatpush1.bf16.msra.mxu0 %v480
        %504 = vmatprep.subr.bf16.mxu0 0
        %505 = vmatpush1.bf16.msra.mxu0 %v481
        %506 = vmatprep.subr.bf16.mxu0 0
        %507 = vmatpush1.bf16.msra.mxu0 0
        %508 = vmatprep.subr.bf16.mxu0 0
        %509 = vmatpush1.bf16.msra.mxu0 0
        %510 = vmatprep.subr.bf16.mxu0 0
        %511 = vmatpush1.bf16.msra.mxu0 0
        %512 = vmatprep.subr.bf16.mxu0 0
        %513 = vmatpush1.bf16.msra.mxu0 0
        %514 = vmatprep.subr.bf16.mxu0 0
        %515 = vmatpush1.bf16.msra.mxu0 0
        %516 = vmatprep.subr.bf16.mxu0 0
        %517 = vmatpush1.bf16.msra.mxu0 0
        %518 = vmatprep.subr.bf16.mxu0 0
        %519 = vmatpush1.bf16.msra.mxu0 0
        %520 = vmatprep.subr.bf16.mxu0 0
        %521 = vmatpush1.bf16.msra.mxu0 0
        %522 = vmatprep.mubr.bf16.mxu0 0
        %523 = vmatmul.mubr.bf16.gmra.mrb[0].mxu0 %v425
        %v524 = vpop.f32.mrb[0].mxu0
        %v525 = vadd.f32 0.0, %v524
        %v526 = vpop.f32.mrb[0].mxu0
        %v527 = vpop.f32.mrb[0].mxu0
        %v528 = vpop.f32.mrb[0].mxu0
        %529 = vdwg.mxu0
        %p530 = scmp.eq.s32.totalorder %s28, 0
        // Predicated region
        $region53: #{tpu_custom_call.1} parent=39 // pred_check
          %p531 = pneg %p530
        $region54: #{tpu_custom_call.1} parent=39 // pred_check_branch
          %533 = sbr.rel (%p531) target = $region56
        $region55: #{tpu_custom_call.1} parent=39 // pred_region
          %v534 = vld [vmem:[%s4] sm:$0x1]
          %v536 = vlaneseq
          %v537 = vshrl.u32 %v536, 7
          %v538 = vsub.s32 0, %v537
          %v539 = vrot.slane %v534, %v538
          %v541 = vadd.f32 %v525, %v539
          %542 = vst [vmem:[%s306] sm:$0xff] %v541
        $region56: #{tpu_custom_call.1} parent=39 // pred_fallthru
          _
        %p543 = scmp.gt.s32.totalorder %s28, 0
        // Predicated region
        $region57: #{tpu_custom_call.1} parent=39 // pred_check
          %p544 = pneg %p543
        $region58: #{tpu_custom_call.1} parent=39 // pred_check_branch
          %546 = sbr.rel (%p544) target = $region60
        $region59: #{tpu_custom_call.1} parent=39 // pred_region
          %v547 = vld [vmem:[%s306] sm:$0xff]
          %v548 = vadd.f32 %v547, %v525
          %549 = vst [vmem:[%s306] sm:$0xff] %v548
        $region60: #{tpu_custom_call.1} parent=39 // pred_fallthru
          _
        %s550 = sand.u32 %s168, 1
        %s551 = scalar_lea.sflag [#allocation4], %s550
        %s552 = sand.u32 %s168, 1
        %s553 = smul.addr %s552, 8
        %s554 = scalar_lea.vmem [#allocation8], %s553
        // Predicated region
        $region61: #{tpu_custom_call.1} parent=39 // pred_check
          %p555 = pneg %p178
        $region62: #{tpu_custom_call.1} parent=39 // pred_check_branch
          %557 = sbr.rel (%p555) target = $region64
        $region63: #{tpu_custom_call.1} parent=39 // pred_region
          %s559 = ssub.s32 128, 128
          %560 = vsyncadd %s551, %s559
          %s561 = smul.addr %s27, 128
          %s562 = scalar_lea.hbm %s5, %s561
          %s564 = sshll.u32 %s554, 4
          %s565 = int_to_ptr.vmem [resolvable:$true] %s564
          %567 = dma.vmem_to_hbm [thread:$0]  %s565, 128, %s562, %s551
        $region64: #{tpu_custom_call.1} parent=39 // pred_fallthru
          _
      $region40: #{tpu_custom_call.1} parent=5 // pred_fallthru
        _
      %p568 = scmp.le.s32.totalorder 2, %s18
      // Predicated region
      $region65: #{tpu_custom_call.1} parent=5 // pred_check
        %p569 = pneg %p568
      $region66: #{tpu_custom_call.1} parent=5 // pred_check_branch
        %571 = sbr.rel (%p569) target = $region68
      $region67: #{tpu_custom_call.1} parent=5 // pred_region
        %s572 = ssub.s32 %s18, 2
        // Predicated region
        $region69: #{tpu_custom_call.1} parent=67 // pred_check
          %p573 = pneg %p184
        $region70: #{tpu_custom_call.1} parent=67 // pred_check_branch
          %575 = sbr.rel (%p573) target = $region72
        $region71: #{tpu_custom_call.1} parent=67 // pred_region
          %s576 = sand.u32 %s169, 1
          %s577 = scalar_lea.sflag [#allocation4], %s576
          %s578 = sand.u32 %s169, 1
          %s579 = smul.addr %s578, 8
          %s580 = scalar_lea.vmem [#allocation8], %s579
          %581 = dma.done %s577, 128
        $region72: #{tpu_custom_call.1} parent=67 // pred_fallthru
          _
      $region68: #{tpu_custom_call.1} parent=5 // pred_fallthru
        _
    $region6: #{tpu_custom_call.1} parent=1 // loop_footer
      %s22 = sadd.s32 1, %s18
    $region7: #{tpu_custom_call.1} parent=1 // loop_footer_branch
      %17 = sbr.rel target = $region3
    $region8: #{tpu_custom_call.1} parent=1 // loop_exit
      _
    %582 = vsyncpa [#allocation3], 1
    %s583 = scalar_lea.sflag [#allocation3], 1
    %584 = vsyncpa %s583, 1
    %585 = vsyncpa [#allocation6], 1
    %586 = vsyncpa [#allocation4], 1
    %s587 = scalar_lea.sflag [#allocation4], 1
    %588 = vsyncpa %s587, 1

</llo_original>
